<compile_context>
chip_gen: v5e
topology: v5e:2x2
jax: 0.10.0
libtpu: 0.0.40
codegen_flags: <defaults>
</compile_context>

<pallas_src>
import math

import numpy as np
import jax
import jax.numpy as jnp
from jax.experimental import pallas as pl
from jax.experimental.pallas import tpu as pltpu

LANE = 128  # vreg lane width; hidden activations are carried zero-padded to 128 lanes

PARAMS = {
    "motion_state_size": 16,
    "units_motion_state": [32],
    "units_omega": [32],
    "units_mu": [32],
    "units_osc": 16,
}


def _round_up(x, m):
    return -(-x // m) * m


# ---------------------------------------------------------------------------
# Parameter init (PyTorch-style Linear init, PReLU alpha = 0.25).
# ---------------------------------------------------------------------------
def _init_linear(key, fan_in, fan_out):
    kw, kb = jax.random.split(key)
    bound = 1.0 / math.sqrt(fan_in)
    w = jax.random.uniform(kw, (fan_in, fan_out), jnp.float32, -bound, bound)
    b = jax.random.uniform(kb, (fan_out,), jnp.float32, -bound, bound)
    return w, b


def init_paramnet(params, key):
    assert params["units_omega"][-1] == params["units_motion_state"][-1], (
        "ParamNet requires last(units_omega) == last(units_motion_state) for "
        "the mu-branch shapes to be consistent (see PyTorch __init__).")
    keys = iter(jax.random.split(key, 64))
    net = {"trunk": [], "omega_hidden": [], "mu_hidden": []}

    in_size = params["motion_state_size"]
    for units in params["units_motion_state"]:
        w, b = _init_linear(next(keys), in_size, units)
        net["trunk"].append((w, b, 0.25))
        in_size = units
    for units in params["units_omega"]:
        w, b = _init_linear(next(keys), in_size, units)
        net["omega_hidden"].append((w, b, 0.25))
        in_size = units
    net["omega_out"] = _init_linear(next(keys), in_size, params["units_osc"])
    # mu branch fan_in continues from `in_size` (faithful to PyTorch __init__).
    for units in params["units_mu"]:
        w, b = _init_linear(next(keys), in_size, units)
        net["mu_hidden"].append((w, b, 0.25))
        in_size = units
    net["mu_out"] = _init_linear(next(keys), in_size, params["units_osc"])
    return net


# ---------------------------------------------------------------------------
# Pack everything into one (L*128 + pad, 128) f32 slab (single resident VMEM
# input stream with a constant index_map):
#   rows [l*128, (l+1)*128) : padded 128x128 weight of fused layer l
#   row  L*128 + 2*l        : bias row of fused layer l (128 lanes)
#   row  L*128 + 2*l + 1    : per-lane PReLU alpha row of fused layer l
# Fused layers: trunk layers, then fused (omega|mu) hidden layers, then the
# fused block-diagonal output layer (omega cols [0,osc), mu cols [osc,2*osc)).
# ---------------------------------------------------------------------------
def pack_paramnet(net, params):
    n_trunk = len(net["trunk"])
    n_head = len(net["omega_hidden"])
    assert n_head == len(net["mu_hidden"]), (
        "fused kernel assumes equal omega/mu head depths")
    units_osc = params["units_osc"]
    assert 2 * units_osc <= LANE
    L = n_trunk + n_head + 1
    vrows = _round_up(2 * L, 8)
    slab = np.zeros((L * LANE + vrows, LANE), np.float32)
    vbase = L * LANE

    def put_w(l, row0, col0, w):
        w = np.asarray(w, np.float32)
        din, dout = w.shape
        assert row0 + din <= LANE and col0 + dout <= LANE, "layer too wide for 128-lane fusion"
        slab[l * LANE + row0:l * LANE + row0 + din, col0:col0 + dout] = w

    def put_b(l, col0, b):
        b = np.asarray(b, np.float32).reshape(-1)
        slab[vbase + 2 * l, col0:col0 + b.shape[0]] = b

    l = 0
    for (w, b, a) in net["trunk"]:
        put_w(l, 0, 0, w)
        put_b(l, 0, b)
        slab[vbase + 2 * l + 1, :] = float(a)
        l += 1

    # Head hidden layers: omega occupies lanes [0,u_om), mu occupies [u_om,u_om+u_mu).
    om_in_off, mu_in_off = 0, 0  # both heads read the shared trunk output first
    for i in range(n_head):
        w_om, b_om, a_om = net["omega_hidden"][i]
        w_mu, b_mu, a_mu = net["mu_hidden"][i]
        u_om, u_mu = w_om.shape[1], w_mu.shape[1]
        assert u_om + u_mu <= LANE
        put_w(l, om_in_off, 0, w_om)
        put_w(l, mu_in_off, u_om, w_mu)
        put_b(l, 0, b_om)
        put_b(l, u_om, b_mu)
        slab[vbase + 2 * l + 1, :u_om] = float(a_om)
        slab[vbase + 2 * l + 1, u_om:] = float(a_mu)
        om_in_off, mu_in_off = 0, u_om
        l += 1

    # Fused output layer (block-diagonal): omega -> cols [0,osc), mu -> cols [osc,2*osc).
    w_om, b_om = net["omega_out"]
    w_mu, b_mu = net["mu_out"]
    put_w(l, om_in_off, 0, w_om)
    put_w(l, mu_in_off, units_osc, w_mu)
    put_b(l, 0, b_om)
    put_b(l, units_osc, b_mu)
    return jnp.asarray(slab), L


# ---------------------------------------------------------------------------
# Kernel: L fused matmuls + per-lane PReLU; final layer writes two narrow
# lane-sliced outputs (omega = relu(z), mu = relu(cos(z))).
# ---------------------------------------------------------------------------
def make_kernel(n_layers, f_pad, units_osc):
    vbase = n_layers * LANE

    def kernel(x_ref, p_ref, om_ref, mu_ref):
        h = x_ref[...]                                       # (TB, f_pad) f32
        for l in range(n_layers):                            # static unrolled loop
            k_in = f_pad if l == 0 else LANE
            w = p_ref[l * LANE:l * LANE + k_in, :]           # (k_in, 128)
            b = p_ref[pl.ds(vbase + 2 * l, 1), :]            # (1, 128) bias row
            z = jnp.dot(h, w, preferred_element_type=jnp.float32) + b
            if l < n_layers - 1:
                a = p_ref[pl.ds(vbase + 2 * l + 1, 1), :]    # (1, 128) PReLU alphas
                h = jnp.where(z >= 0, z, a * z)
            else:
                # omega lanes [0, osc): relu; mu lanes [osc, 2*osc): relu(cos).
                om_ref[...] = jnp.maximum(z[:, :units_osc], 0.0)
                mu_ref[...] = jnp.maximum(
                    jnp.cos(z[:, units_osc:2 * units_osc]), 0.0)

    return kernel


def paramnet_forward(desired_motion, slab, n_layers, params, *, max_tile=512):
    B, F = desired_motion.shape
    units_osc = params["units_osc"]
    F_pad = _round_up(F, 8)
    assert F_pad <= LANE

    # Batch tiling: multiple of 8; prefer >=2 tiles so v7x's two TensorCores
    # both get work (grid axis is "parallel"), then grow the tile up to
    # max_tile (sweep {256,512,1024}) so the ~0.35us/step overhead amortizes.
    # VMEM is a non-issue: even at TB=1024 the blocks + slab are ~1 MiB.
    B8 = _round_up(B, 8)
    TB = min(max_tile, _round_up(-(-B8 // 2), 8))
    B_pad = _round_up(B8, TB)
    grid = (B_pad // TB,)

    # Pad rows (and features to a multiple of 8) only when needed; padded rows
    # stay zero through the network and are sliced away below.
    if B_pad != B or F_pad != F:
        x = jnp.zeros((B_pad, F_pad), jnp.float32)
        x = x.at[:B, :F].set(desired_motion.astype(jnp.float32))
    else:
        x = desired_motion.astype(jnp.float32)

    cost = pl.CostEstimate(
        flops=int(2 * B_pad * (F_pad * LANE + (n_layers - 1) * LANE * LANE)),
        transcendentals=int(B_pad * units_osc),
        bytes_accessed=int((B_pad * F_pad + slab.size + 2 * B_pad * units_osc) * 4),
    )

    omega_p, mu_p = pl.pallas_call(
        make_kernel(n_layers, F_pad, units_osc),
        out_shape=(jax.ShapeDtypeStruct((B_pad, units_osc), jnp.float32),
                   jax.ShapeDtypeStruct((B_pad, units_osc), jnp.float32)),
        grid=grid,
        in_specs=[
            pl.BlockSpec((TB, F_pad), lambda i: (i, 0)),     # batch tile of x (native width)
            pl.BlockSpec(slab.shape, lambda i: (0, 0)),      # param slab, resident (fetched once)
        ],
        out_specs=(
            pl.BlockSpec((TB, units_osc), lambda i: (i, 0)), # omega
            pl.BlockSpec((TB, units_osc), lambda i: (i, 0)), # mu
        ),
        compiler_params=pltpu.CompilerParams(
            dimension_semantics=("parallel",)),
        cost_estimate=cost,
    )(x, slab)

    if B_pad != B:
        omega_p, mu_p = omega_p[:B], mu_p[:B]
    return omega_p, mu_p


# ---------------------------------------------------------------------------
# Pure-JAX reference (operates on the unpacked per-layer parameters).
# ---------------------------------------------------------------------------
def paramnet_ref(x, net):
    def prelu(v, a):
        return jnp.where(v >= 0, v, a * v)

    h = x
    for (w, b, a) in net["trunk"]:
        h = prelu(h @ w + b, a)
    o = h
    for (w, b, a) in net["omega_hidden"]:
        o = prelu(o @ w + b, a)
    w, b = net["omega_out"]
    o = jnp.maximum(o @ w + b, 0.0)
    m = h
    for (w, b, a) in net["mu_hidden"]:
        m = prelu(m @ w + b, a)
    w, b = net["mu_out"]
    m = jnp.maximum(jnp.cos(m @ w + b), 0.0)
    return o, m


if __name__ == "__main__":
    key = jax.random.PRNGKey(0)
    k_data, k_data2, k_params = jax.random.split(key, 3)

    net = init_paramnet(PARAMS, k_params)
    slab, n_layers = pack_paramnet(net, PARAMS)

    # Small batch (single tile).
    B = 8
    dm = jax.random.normal(k_data, (B, PARAMS["motion_state_size"]), jnp.float32)
    omega, mu = paramnet_forward(dm, slab, n_layers, PARAMS)
    jax.block_until_ready((omega, mu))
    omega_ref, mu_ref = paramnet_ref(dm, net)
    assert omega.shape == (B, PARAMS["units_osc"])
    assert mu.shape == (B, PARAMS["units_osc"])
    assert jnp.allclose(omega, omega_ref, atol=1e-5, rtol=1e-5)
    assert jnp.allclose(mu, mu_ref, atol=1e-5, rtol=1e-5)

    # Ragged batch (exercises row padding and a multi-tile parallel grid).
    B2 = 20
    dm2 = jax.random.normal(k_data2, (B2, PARAMS["motion_state_size"]), jnp.float32)
    omega2, mu2 = paramnet_forward(dm2, slab, n_layers, PARAMS)
    jax.block_until_ready((omega2, mu2))
    omega2_ref, mu2_ref = paramnet_ref(dm2, net)
    assert omega2.shape == (B2, PARAMS["units_osc"])
    assert mu2.shape == (B2, PARAMS["units_osc"])
    assert jnp.allclose(omega2, omega2_ref, atol=1e-5, rtol=1e-5)
    assert jnp.allclose(mu2, mu2_ref, atol=1e-5, rtol=1e-5)

    print("KERNEL_OK")
</pallas_src>

<mosaic_0001>
module attributes {stable_mosaic.version = 11 : i64} {
  func.func @kernel(%arg0: i32, %arg1: memref<8x16xf32, #tpu.memory_space<vmem>>, %arg2: memref<392x128xf32, #tpu.memory_space<vmem>>, %arg3: memref<8x16xf32, #tpu.memory_space<vmem>>, %arg4: memref<8x16xf32, #tpu.memory_space<vmem>>) attributes {dimension_semantics = [#tpu.dimension_semantics<parallel>], iteration_bounds = array<i64: 1>, scalar_prefetch = 0 : i64, scratch_operands = 0 : i64, tpu.core_type = #tpu.core_type<tc>, window_params = [{transform_indices = @transform_0, window_bounds = array<i64: 8, 16>}, {pipeline_mode = #tpu.pipeline_mode<synchronous>, transform_indices = @transform_1, window_bounds = array<i64: 392, 128>}, {transform_indices = @transform_2, window_bounds = array<i64: 8, 16>}, {transform_indices = @transform_3, window_bounds = array<i64: 8, 16>}]} {
    %c0 = arith.constant 0 : index
    %c0_0 = arith.constant 0 : index
    %0 = vector.load %arg1[%c0, %c0_0] : memref<8x16xf32, #tpu.memory_space<vmem>>, vector<8x16xf32>
    %c0_1 = arith.constant 0 : index
    %c0_2 = arith.constant 0 : index
    %1 = vector.load %arg2[%c0_1, %c0_2] : memref<392x128xf32, #tpu.memory_space<vmem>>, vector<16x128xf32>
    %c384 = arith.constant 384 : index
    %c0_3 = arith.constant 0 : index
    %2 = vector.load %arg2[%c384, %c0_3] : memref<392x128xf32, #tpu.memory_space<vmem>>, vector<1x128xf32>
    %cst = arith.constant dense<0.000000e+00> : vector<8x128xf32>
    %3 = tpu.matmul %0, %1, %cst {dimension_numbers = #tpu.dot_dimension_numbers<[1], [0], [0], [1], [0, 0, 1, 1], [], []>} : vector<8x16xf32>, vector<16x128xf32>, vector<8x128xf32> -> vector<8x128xf32>
    %4 = vector.broadcast %2 : vector<1x128xf32> to vector<8x128xf32>
    %5 = arith.addf %3, %4 : vector<8x128xf32>
    %c385 = arith.constant 385 : index
    %c0_4 = arith.constant 0 : index
    %6 = vector.load %arg2[%c385, %c0_4] : memref<392x128xf32, #tpu.memory_space<vmem>>, vector<1x128xf32>
    %cst_5 = arith.constant 0.000000e+00 : f32
    %7 = vector.broadcast %cst_5 : f32 to vector<8x128xf32>
    %8 = arith.cmpf oge, %5, %7 : vector<8x128xf32>
    %9 = vector.broadcast %6 : vector<1x128xf32> to vector<8x128xf32>
    %10 = arith.mulf %9, %5 : vector<8x128xf32>
    %11 = arith.select %8, %5, %10 : vector<8x128xi1>, vector<8x128xf32>
    %c128 = arith.constant 128 : index
    %c0_6 = arith.constant 0 : index
    %12 = vector.load %arg2[%c128, %c0_6] : memref<392x128xf32, #tpu.memory_space<vmem>>, vector<128x128xf32>
    %c386 = arith.constant 386 : index
    %c0_7 = arith.constant 0 : index
    %13 = vector.load %arg2[%c386, %c0_7] : memref<392x128xf32, #tpu.memory_space<vmem>>, vector<1x128xf32>
    %cst_8 = arith.constant dense<0.000000e+00> : vector<8x128xf32>
    %14 = tpu.matmul %11, %12, %cst_8 {dimension_numbers = #tpu.dot_dimension_numbers<[1], [0], [0], [1], [0, 0, 1, 1], [], []>} : vector<8x128xf32>, vector<128x128xf32>, vector<8x128xf32> -> vector<8x128xf32>
    %15 = vector.broadcast %13 : vector<1x128xf32> to vector<8x128xf32>
    %16 = arith.addf %14, %15 : vector<8x128xf32>
    %c387 = arith.constant 387 : index
    %c0_9 = arith.constant 0 : index
    %17 = vector.load %arg2[%c387, %c0_9] : memref<392x128xf32, #tpu.memory_space<vmem>>, vector<1x128xf32>
    %cst_10 = arith.constant 0.000000e+00 : f32
    %18 = vector.broadcast %cst_10 : f32 to vector<8x128xf32>
    %19 = arith.cmpf oge, %16, %18 : vector<8x128xf32>
    %20 = vector.broadcast %17 : vector<1x128xf32> to vector<8x128xf32>
    %21 = arith.mulf %20, %16 : vector<8x128xf32>
    %22 = arith.select %19, %16, %21 : vector<8x128xi1>, vector<8x128xf32>
    %c256 = arith.constant 256 : index
    %c0_11 = arith.constant 0 : index
    %23 = vector.load %arg2[%c256, %c0_11] : memref<392x128xf32, #tpu.memory_space<vmem>>, vector<128x128xf32>
    %c388 = arith.constant 388 : index
    %c0_12 = arith.constant 0 : index
    %24 = vector.load %arg2[%c388, %c0_12] : memref<392x128xf32, #tpu.memory_space<vmem>>, vector<1x128xf32>
    %cst_13 = arith.constant dense<0.000000e+00> : vector<8x128xf32>
    %25 = tpu.matmul %22, %23, %cst_13 {dimension_numbers = #tpu.dot_dimension_numbers<[1], [0], [0], [1], [0, 0, 1, 1], [], []>} : vector<8x128xf32>, vector<128x128xf32>, vector<8x128xf32> -> vector<8x128xf32>
    %26 = vector.broadcast %24 : vector<1x128xf32> to vector<8x128xf32>
    %27 = arith.addf %25, %26 : vector<8x128xf32>
    %28 = vector.extract_strided_slice %27 {offsets = [0, 0], sizes = [8, 16], strides = [1, 1]} : vector<8x128xf32> to vector<8x16xf32>
    %cst_14 = arith.constant 0.000000e+00 : f32
    %29 = vector.broadcast %cst_14 : f32 to vector<8x16xf32>
    %30 = arith.maximumf %28, %29 : vector<8x16xf32>
    %c0_15 = arith.constant 0 : index
    %c0_16 = arith.constant 0 : index
    %31 = vector.load %arg3[%c0_15, %c0_16] : memref<8x16xf32, #tpu.memory_space<vmem>>, vector<8x16xf32>
    tpu.vector_store %arg3[%c0_15, %c0_16], %30 {strides = array<i32>} : memref<8x16xf32, #tpu.memory_space<vmem>>, vector<8x16xf32>,
    %32 = vector.extract_strided_slice %27 {offsets = [0, 16], sizes = [8, 16], strides = [1, 1]} : vector<8x128xf32> to vector<8x16xf32>
    %33 = math.cos %32 : vector<8x16xf32>
    %cst_17 = arith.constant 0.000000e+00 : f32
    %34 = vector.broadcast %cst_17 : f32 to vector<8x16xf32>
    %35 = arith.maximumf %33, %34 : vector<8x16xf32>
    %c0_18 = arith.constant 0 : index
    %c0_19 = arith.constant 0 : index
    %36 = vector.load %arg4[%c0_18, %c0_19] : memref<8x16xf32, #tpu.memory_space<vmem>>, vector<8x16xf32>
    tpu.vector_store %arg4[%c0_18, %c0_19], %35 {strides = array<i32>} : memref<8x16xf32, #tpu.memory_space<vmem>>, vector<8x16xf32>,
    return
  }
  func.func @transform_0(%arg0: i32) -> (i32, i32) {
    %c0_i32 = arith.constant 0 : i32
    %c0_i32_0 = arith.constant 0 : i32
    return %arg0, %c0_i32 : i32, i32
  }
  func.func @transform_1(%arg0: i32) -> (i32, i32) {
    %c0_i32 = arith.constant 0 : i32
    %c0_i32_0 = arith.constant 0 : i32
    %c0_i32_1 = arith.constant 0 : i32
    return %c0_i32, %c0_i32_0 : i32, i32
  }
  func.func @transform_2(%arg0: i32) -> (i32, i32) {
    %c0_i32 = arith.constant 0 : i32
    %c0_i32_0 = arith.constant 0 : i32
    return %arg0, %c0_i32 : i32, i32
  }
  func.func @transform_3(%arg0: i32) -> (i32, i32) {
    %c0_i32 = arith.constant 0 : i32
    %c0_i32_0 = arith.constant 0 : i32
    return %arg0, %c0_i32 : i32, i32
  }
}

</mosaic_0001>

<llo_original>
// kernel: tpu_custom_call.1
$region0: #{tpu_custom_call.1}
  #allocation0 [shape = 'u32[]', space=smem, size = 0x4, offset = 0x4, fixed_abs, tag = 'smem constant byte address 0x4 - core index']
  #allocation1 [shape = 'u32[72,128]{1,0:T(1,128)}', space=vmem, size = 0x9000, scoped, tag = 'internal scratch']
  %s0 = inlined_call_operand.hbm [shape: f32[8,16], index: 0, kind: input, shape index: {}]
  %s1 = inlined_call_operand.hbm [shape: f32[392,128], index: 1, kind: input, shape index: {}]
  %s2 = inlined_call_operand.hbm [shape: f32[8,16], index: 2, kind: output, shape index: {0}]
  %s3 = inlined_call_operand.hbm [shape: f32[8,16], index: 3, kind: output, shape index: {1}]
  %4 = xla_tuple %s2, %s3
  %s5 = sld [smem:[#allocation0]]
  $region34: #{tpu_custom_call.1} parent=0
    _
  %s7 = ssub.s32 1, %s5
  %s8 = scalar_select 0, %s7, %s5
  $region1: #{tpu_custom_call.1} parent=0
    #allocation2 [shape = 'u8[4096]{0}', space=vmem, size = 0x1000, scoped, tag = 'input window, operand 0, single buffered']
    #allocation3 [shape = 's32[1]{0}', space=sflag, size = 0x4, scoped, tag = 'scoped memory for tpu_custom_call.1']
    #allocation4 [shape = 's32[1]{0}', space=sflag, size = 0x4, scoped, tag = 'scoped memory for tpu_custom_call.1']
    #allocation5 [shape = 'u8[200704]{0}', space=vmem, size = 0x31000, scoped, tag = 'input window, operand 1, single buffered']
    #allocation6 [shape = 's32[1]{0}', space=sflag, size = 0x4, scoped, tag = 'scoped memory for tpu_custom_call.1']
    #allocation7 [shape = 'u8[4096]{0}', space=vmem, size = 0x1000, scoped, tag = 'output window, operand 0, single buffered']
    #allocation8 [shape = 'u8[4096]{0}', space=vmem, size = 0x1000, scoped, tag = 'output window, operand 1, single buffered']
    #allocation9 [shape = 's32[1]{0}', space=sflag, size = 0x4, scoped, tag = 'scoped memory for tpu_custom_call.1']
    %9 = vsyncpa [#allocation3], 0
    %10 = vsyncpa [#allocation6], 0
    %11 = vsyncpa [#allocation4], 0
    %12 = vsyncpa [#allocation9], 0
    // Predicated region
    $region2: #{tpu_custom_call.1} parent=1 // pred_check
      _
    $region3: #{tpu_custom_call.1} parent=1 // pred_check_branch
      %14 = sbr.rel (0) target = $region5
    $region4: #{tpu_custom_call.1} parent=1 // pred_region
      %16 = vsyncadd [#allocation3], 0
      %s18 = sshll.u32 %s0, 4
      %s19 = int_to_ptr.hbm [resolvable:$true] %s18
      %s20 = sshll.u32 [#allocation2], 4
      %s21 = int_to_ptr.vmem [resolvable:$true] %s20
      %23 = dma.hbm_to_vmem [thread:$0]  %s19, 128, %s21, [#allocation3]
    $region5: #{tpu_custom_call.1} parent=1 // pred_fallthru
      _
    // Predicated region
    $region6: #{tpu_custom_call.1} parent=1 // pred_check
      _
    $region7: #{tpu_custom_call.1} parent=1 // pred_check_branch
      %25 = sbr.rel (0) target = $region9
    $region8: #{tpu_custom_call.1} parent=1 // pred_region
      %27 = vsyncadd [#allocation6], 0
      %s28 = sshll.u32 %s1, 4
      %s29 = int_to_ptr.hbm [resolvable:$true] %s28
      %s30 = sshll.u32 [#allocation5], 4
      %s31 = int_to_ptr.vmem [resolvable:$true] %s30
      %36 = dma.hbm_to_vmem [thread:$0]  %s29, 6272, %s31, [#allocation6], 128, 128, 8
    $region9: #{tpu_custom_call.1} parent=1 // pred_fallthru
      _
    // Predicated region
    $region10: #{tpu_custom_call.1} parent=1 // pred_check
      _
    $region11: #{tpu_custom_call.1} parent=1 // pred_check_branch
      %38 = sbr.rel (0) target = $region13
    $region12: #{tpu_custom_call.1} parent=1 // pred_region
      %40 = dma.done [#allocation3], 128
    $region13: #{tpu_custom_call.1} parent=1 // pred_fallthru
      _
    // Predicated region
    $region14: #{tpu_custom_call.1} parent=1 // pred_check
      _
    $region15: #{tpu_custom_call.1} parent=1 // pred_check_branch
      %42 = sbr.rel (0) target = $region17
    $region16: #{tpu_custom_call.1} parent=1 // pred_region
      %44 = dma.done [#allocation6], 6272
    $region17: #{tpu_custom_call.1} parent=1 // pred_fallthru
      _
    %v45 = vld [vmem:[#allocation2] sm:$0xff]
    %v46 = vld [vmem:[#allocation5] sm:$0xff]
    %v47 = vld [vmem:[#allocation5 + $0x8] sm:$0xff]
    %v48 = vld [vmem:[#allocation5 + $0x180] sm:$0x1]
    %v49 = vperm.slane %v48, 0
    %vm50 = vcmask 130048
    %v52 = vsel %vm50, %v45, 0
    %54 = vmatpush.msra.mxu0 0.0
    %55 = vmatpush.msra.mxu0 0.0
    %56 = vmatpush.msra.mxu0 0.0
    %57 = vmatpush.msra.mxu0 0.0
    %58 = vmatpush.msra.mxu0 0.0
    %59 = vmatpush.msra.mxu0 0.0
    %60 = vmatpush.msra.mxu0 0.0
    %61 = vmatpush.msra.mxu0 0.0
    %62 = vmatpush.msra.mxu0 0.0
    %63 = vmatpush.msra.mxu0 0.0
    %64 = vmatpush.msra.mxu0 0.0
    %65 = vmatpush.msra.mxu0 0.0
    %66 = vmatpush.msra.mxu0 0.0
    %67 = vmatpush.msra.mxu0 0.0
    %68 = vmatpush.msra.mxu0 %v47
    %69 = vmatpush.msra.mxu0 %v46
    %70 = vmatmul.f32.gmra.mxu0 %v52
    %v71 = vpop.f32.mrf.mxu0
    %v72 = vadd.f32 %v49, %v71
    %73 = vdwg.mxu0
    %v74 = vld [vmem:[#allocation5 + $0x181] sm:$0x1]
    %vm75 = vcmp.ge.f32.partialorder %v72, 0.0
    %v76 = vperm.slane %v74, 0
    %v77 = vmul.f32 %v76, %v72
    %v78 = vsel %vm75, %v72, %v77
    %v79 = vld [vmem:[#allocation5 + $0x80] sm:$0xff]
    %v80 = vld [vmem:[#allocation5 + $0x88] sm:$0xff]
    %v81 = vld [vmem:[#allocation5 + $0x90] sm:$0xff]
    %v82 = vld [vmem:[#allocation5 + $0x98] sm:$0xff]
    %v83 = vld [vmem:[#allocation5 + $0xa0] sm:$0xff]
    %v84 = vld [vmem:[#allocation5 + $0xa8] sm:$0xff]
    %v85 = vld [vmem:[#allocation5 + $0xb0] sm:$0xff]
    %v86 = vld [vmem:[#allocation5 + $0xb8] sm:$0xff]
    %v87 = vld [vmem:[#allocation5 + $0xc0] sm:$0xff]
    %v88 = vld [vmem:[#allocation5 + $0xc8] sm:$0xff]
    %v89 = vld [vmem:[#allocation5 + $0xd0] sm:$0xff]
    %v90 = vld [vmem:[#allocation5 + $0xd8] sm:$0xff]
    %v91 = vld [vmem:[#allocation5 + $0xe0] sm:$0xff]
    %v92 = vld [vmem:[#allocation5 + $0xe8] sm:$0xff]
    %v93 = vld [vmem:[#allocation5 + $0xf0] sm:$0xff]
    %v94 = vld [vmem:[#allocation5 + $0xf8] sm:$0xff]
    %v95 = vld [vmem:[#allocation5 + $0x182] sm:$0x1]
    %v96 = vperm.slane %v95, 0
    %97 = vmatpush.msra.mxu0 %v94
    %98 = vmatpush.msra.mxu0 %v93
    %99 = vmatpush.msra.mxu0 %v92
    %100 = vmatpush.msra.mxu0 %v91
    %101 = vmatpush.msra.mxu0 %v90
    %102 = vmatpush.msra.mxu0 %v89
    %103 = vmatpush.msra.mxu0 %v88
    %104 = vmatpush.msra.mxu0 %v87
    %105 = vmatpush.msra.mxu0 %v86
    %106 = vmatpush.msra.mxu0 %v85
    %107 = vmatpush.msra.mxu0 %v84
    %108 = vmatpush.msra.mxu0 %v83
    %109 = vmatpush.msra.mxu0 %v82
    %110 = vmatpush.msra.mxu0 %v81
    %111 = vmatpush.msra.mxu0 %v80
    %112 = vmatpush.msra.mxu0 %v79
    %113 = vmatmul.f32.gmra.mxu0 %v78
    %v114 = vpop.f32.mrf.mxu0
    %v115 = vadd.f32 %v96, %v114
    %116 = vdwg.mxu0
    %v117 = vld [vmem:[#allocation5 + $0x183] sm:$0x1]
    %vm118 = vcmp.ge.f32.partialorder %v115, 0.0
    %v119 = vperm.slane %v117, 0
    %v120 = vmul.f32 %v119, %v115
    %v121 = vsel %vm118, %v115, %v120
    %v122 = vld [vmem:[#allocation5 + $0x100] sm:$0xff]
    %v123 = vld [vmem:[#allocation5 + $0x108] sm:$0xff]
    %v124 = vld [vmem:[#allocation5 + $0x110] sm:$0xff]
    %v125 = vld [vmem:[#allocation5 + $0x118] sm:$0xff]
    %v126 = vld [vmem:[#allocation5 + $0x120] sm:$0xff]
    %v127 = vld [vmem:[#allocation5 + $0x128] sm:$0xff]
    %v128 = vld [vmem:[#allocation5 + $0x130] sm:$0xff]
    %v129 = vld [vmem:[#allocation5 + $0x138] sm:$0xff]
    %v130 = vld [vmem:[#allocation5 + $0x140] sm:$0xff]
    %v131 = vld [vmem:[#allocation5 + $0x148] sm:$0xff]
    %v132 = vld [vmem:[#allocation5 + $0x150] sm:$0xff]
    %v133 = vld [vmem:[#allocation5 + $0x158] sm:$0xff]
    %v134 = vld [vmem:[#allocation5 + $0x160] sm:$0xff]
    %v135 = vld [vmem:[#allocation5 + $0x168] sm:$0xff]
    %v136 = vld [vmem:[#allocation5 + $0x170] sm:$0xff]
    %v137 = vld [vmem:[#allocation5 + $0x178] sm:$0xff]
    %v138 = vld [vmem:[#allocation5 + $0x184] sm:$0x1]
    %v139 = vperm.slane %v138, 0
    %140 = vmatpush.msra.mxu0 %v137
    %141 = vmatpush.msra.mxu0 %v136
    %142 = vmatpush.msra.mxu0 %v135
    %143 = vmatpush.msra.mxu0 %v134
    %144 = vmatpush.msra.mxu0 %v133
    %145 = vmatpush.msra.mxu0 %v132
    %146 = vmatpush.msra.mxu0 %v131
    %147 = vmatpush.msra.mxu0 %v130
    %148 = vmatpush.msra.mxu0 %v129
    %149 = vmatpush.msra.mxu0 %v128
    %150 = vmatpush.msra.mxu0 %v127
    %151 = vmatpush.msra.mxu0 %v126
    %152 = vmatpush.msra.mxu0 %v125
    %153 = vmatpush.msra.mxu0 %v124
    %154 = vmatpush.msra.mxu0 %v123
    %155 = vmatpush.msra.mxu0 %v122
    %156 = vmatmul.f32.gmra.mxu0 %v121
    %v157 = vpop.f32.mrf.mxu0
    %v158 = vadd.f32 %v139, %v157
    %159 = vdwg.mxu0
    %v160 = vmax.f32 %v158, 0.0
    %161 = vst.msk [vmem:[#allocation7] sm:$0xff] %vm50, %v160
    %v162 = vand.u32 2147483647, %v158
    %vm163 = vcmp.le.f32.partialorder %v162, 0.7853982
    %vm164 = vcmp.lt.s32.totalorder %v158, 0
    %v165 = vand.u32 %v158, 2139095040
    %v166 = vshrl.u32 %v165, 23
    %v167 = vsub.s32 %v166, 127
    %v168 = vand.u32 2147483647, %v158
    %v169 = vand.u32 %v168, 8388607
    %v170 = vor.u32 %v169, 8388608
    %v171 = vsub.s32 0, %v170
    %v172 = vadd.s32 %v167, 1
    %vm173 = vcmp.gt.s32.totalorder %v172, 0
    %v174 = vsel %vm173, %v172, 0
    %v175 = vshrl.u32 %v174, 5
    %v176 = vand.u32 %v174, 31
    %v177 = vsub.s32 32, %v176
    %v178 = vshrl.u32 683565275, %v177
    %v179 = vshll.u32 683565275, %v176
    %v180 = vshrl.u32 2475754826, %v177
    %v181 = vor.u32 %v179, %v180
    %v182 = vshll.u32 2475754826, %v176
    %v183 = vshrl.u32 2131351028, %v177
    %v184 = vor.u32 %v182, %v183
    %v185 = vshll.u32 2131351028, %v176
    %v186 = vshrl.u32 2102212464, %v177
    %v187 = vor.u32 %v185, %v186
    %v188 = vshll.u32 2102212464, %v176
    %v189 = vshrl.u32 920167782, %v177
    %v190 = vor.u32 %v188, %v189
    %v191 = vshll.u32 920167782, %v176
    %v192 = vshrl.u32 1326507024, %v177
    %v193 = vor.u32 %v191, %v192
    %vm194 = vcmp.lt.s32.totalorder %v175, 1
    %vm195 = vcmp.lt.s32.totalorder %v175, 2
    %vm196 = vcmp.lt.s32.totalorder %v175, 3
    %vm197 = vcmp.lt.s32.totalorder %v175, 4
    %v198 = vsel %vm194, %v178, %v181
    %v199 = vsel %vm197, %v187, 2102212464
    %v200 = vsel %vm196, %v184, %v199
    %v201 = vsel %vm195, %v198, %v200
    %v202 = vsel %vm194, %v181, %v184
    %v203 = vsel %vm197, %v190, 920167782
    %v204 = vsel %vm196, %v187, %v203
    %v205 = vsel %vm195, %v202, %v204
    %v206 = vsel %vm194, %v184, %v187
    %v207 = vsel %vm197, %v193, 1326507024
    %v208 = vsel %vm196, %v190, %v207
    %v209 = vsel %vm195, %v206, %v208
    %v210 = vshll.u32 %v170, 8
    %v211 = vand.u32 %v210, 65535
    %v212 = vshrl.u32 %v210, 16
    %v213 = vand.u32 %v209, 65535
    %v214 = vshrl.u32 %v209, 16
    %v215 = vmul.u32 %v211, %v213
    %v216 = vmul.u32 %v211, %v214
    %v217 = vmul.u32 %v212, %v213
    %v218 = vmul.u32 %v212, %v214
    %v219 = vshll.u32 %v216, 16
    %v220 = vshrl.u32 %v216, 16
    %v221 = vshll.u32 %v217, 16
    %v222 = vshrl.u32 %v217, 16
    %vm223 = vc.u32 %v215, %v219
    %v224 = vsel %vm223, 1, 0
    %v225 = vadd.s32 %v215, %v219
    %v226 = vadd.s32 %v218, %v224
    %vm227 = vc.u32 %v225, %v221
    %v228 = vsel %vm227, 1, 0
    %v229 = vadd.s32 %v225, %v221
    %v230 = vadd.s32 %v226, %v228
    %v231 = vadd.s32 %v230, %v220
    %v232 = vadd.s32 %v231, %v222
    %v233 = vand.u32 %v210, 65535
    %v234 = vshrl.u32 %v210, 16
    %v235 = vand.u32 %v205, 65535
    %v236 = vshrl.u32 %v205, 16
    %v237 = vmul.u32 %v233, %v235
    %v238 = vmul.u32 %v233, %v236
    %v239 = vmul.u32 %v234, %v235
    %v240 = vmul.u32 %v234, %v236
    %v241 = vshll.u32 %v238, 16
    %v242 = vshrl.u32 %v238, 16
    %v243 = vshll.u32 %v239, 16
    %v244 = vshrl.u32 %v239, 16
    %vm245 = vc.u32 %v237, %v241
    %v246 = vsel %vm245, 1, 0
    %v247 = vadd.s32 %v237, %v241
    %v248 = vadd.s32 %v240, %v246
    %vm249 = vc.u32 %v247, %v243
    %v250 = vsel %vm249, 1, 0
    %v251 = vadd.s32 %v247, %v243
    %v252 = vadd.s32 %v248, %v250
    %v253 = vadd.s32 %v252, %v242
    %v254 = vadd.s32 %v253, %v244
    %v255 = vmul.u32 %v210, %v201
    %v256 = vadd.s32 %v232, %v251
    %vm257 = vc.u32 %v232, %v251
    %v258 = vadd.s32 %v254, 1
    %v259 = vsel %vm257, %v258, %v254
    %v260 = vadd.s32 %v255, %v259
    %v261 = vadd.s32 %v260, 536870912
    %v262 = vshrl.u32 %v261, 30
    %v263 = vshll.u32 %v262, 30
    %v264 = vsub.s32 %v260, %v263
    %vm265 = vcmp.lt.s32.totalorder %v264, 0
    %v266 = vsub.s32 0, %v264
    %v267 = vsel %vm265, %v266, %v264
    %v268 = vclz %v267
    %v269 = vsub.s32 %v268, 2
    %vm270 = vcmp.gt.s32.totalorder 0, %v269
    %v271 = vsel %vm270, 0, %v269
    %v272 = vsub.s32 32, %v271
    %v273 = vshll.u32 %v264, %v271
    %v274 = vshrl.u32 %v256, %v272
    %v275 = vor.u32 %v273, %v274
    %v276 = vsub.s32 4294967266, %v271
    %v277 = vadd.s32 %v276, 127
    %v278 = vshll.u32 %v277, 23
    %v279 = vor.u32 4788187, %v278
    %v280 = vand.u32 2147483647, %v279
    %v282 = vcvt.s32.f32 %v275
    %v283 = vmul.f32 %v282, %v280
    %v284 = vxor.u32 %v283, 2147483648
    %v285 = vsel %vm164, %v284, %v283
    %v286 = vsub.s32 4, %v262
    %v287 = vsel %vm164, %v286, %v262
    %v288 = vsel %vm163, %v158, %v285
    %v289 = vsel %vm163, 0, %v287
    %v290 = vmul.f32 %v288, %v288
    %v291 = vmul.f32 %v290, -0.001358992
    %v292 = vadd.f32 %v291, 0.041655596
    %v293 = vmul.f32 %v290, %v292
    %v294 = vadd.f32 %v293, -0.4999988
    %v295 = vmul.f32 %v290, %v294
    %v296 = vadd.f32 1.0, %v295
    %v297 = vmul.f32 %v288, %v288
    %v298 = vmul.f32 %v297, -0.00019511016
    %v299 = vadd.f32 %v298, 0.008332121
    %v300 = vmul.f32 %v297, %v299
    %v301 = vadd.f32 %v300, -0.16666654
    %v302 = vmul.f32 %v297, %v301
    %v303 = vadd.f32 %v302, 1.0
    %v304 = vmul.f32 %v303, %v288
    %vm305 = vweird.f32 %v158
    %v306 = vand.u32 %v289, 3
    %vm307 = vcmp.lt.s32.totalorder %v306, 2
    %vm308 = vcmp.eq.s32.totalorder %v306, 0
    %v309 = vxor.u32 %v304, 2147483648
    %v310 = vsel %vm308, %v296, %v309
    %vm311 = vcmp.eq.s32.totalorder %v306, 2
    %v312 = vxor.u32 %v296, 2147483648
    %v313 = vsel %vm311, %v312, %v304
    %v314 = vsel %vm307, %v310, %v313
    %v315 = vsel %vm305, nan, %v314
    %v316 = vmax.f32 %v315, 0.0
    %318 = vrot.lane.b32.xlu0 %v316, 112
    %v319 = vpop.permute.xlu0 %318
    %321 = vst.msk [vmem:[#allocation8] sm:$0xff] %vm50, %v319
    // Predicated region
    $region18: #{tpu_custom_call.1} parent=1 // pred_check
      _
    $region19: #{tpu_custom_call.1} parent=1 // pred_check_branch
      %323 = sbr.rel (0) target = $region21
    $region20: #{tpu_custom_call.1} parent=1 // pred_region
      %325 = vsyncadd [#allocation4], 0
      %s327 = sshll.u32 [#allocation7], 4
      %s328 = int_to_ptr.vmem [resolvable:$true] %s327
      %s329 = sshll.u32 %s2, 4
      %s330 = int_to_ptr.hbm [resolvable:$true] %s329
      %332 = dma.vmem_to_hbm [thread:$0]  %s328, 128, %s330, [#allocation4]
    $region21: #{tpu_custom_call.1} parent=1 // pred_fallthru
      _
    // Predicated region
    $region22: #{tpu_custom_call.1} parent=1 // pred_check
      _
    $region23: #{tpu_custom_call.1} parent=1 // pred_check_branch
      %334 = sbr.rel (0) target = $region25
    $region24: #{tpu_custom_call.1} parent=1 // pred_region
      %336 = vsyncadd [#allocation9], 0
      %s338 = sshll.u32 [#allocation8], 4
      %s339 = int_to_ptr.vmem [resolvable:$true] %s338
      %s340 = sshll.u32 %s3, 4
      %s341 = int_to_ptr.hbm [resolvable:$true] %s340
      %343 = dma.vmem_to_hbm [thread:$0]  %s339, 128, %s341, [#allocation9]
    $region25: #{tpu_custom_call.1} parent=1 // pred_fallthru
      _
    // Predicated region
    $region26: #{tpu_custom_call.1} parent=1 // pred_check
      _
    $region27: #{tpu_custom_call.1} parent=1 // pred_check_branch
      %345 = sbr.rel (0) target = $region29
    $region28: #{tpu_custom_call.1} parent=1 // pred_region
      %347 = dma.done [#allocation4], 128
    $region29: #{tpu_custom_call.1} parent=1 // pred_fallthru
      _
    // Predicated region
    $region30: #{tpu_custom_call.1} parent=1 // pred_check
      _
    $region31: #{tpu_custom_call.1} parent=1 // pred_check_branch
      %349 = sbr.rel (0) target = $region33
    $region32: #{tpu_custom_call.1} parent=1 // pred_region
      %351 = dma.done [#allocation9], 128
    $region33: #{tpu_custom_call.1} parent=1 // pred_fallthru
      _
    %352 = vsyncpa [#allocation3], 1
    %353 = vsyncpa [#allocation6], 1
    %354 = vsyncpa [#allocation4], 1
    %355 = vsyncpa [#allocation9], 1

</llo_original>
